<compile_context>
chip_gen: v5e
topology: v5e:2x2
jax: 0.10.0
libtpu: 0.0.40
codegen_flags: <defaults>
</compile_context>

<pallas_src>
import functools

import jax
import jax.numpy as jnp
import numpy as np
from jax import lax
from jax.experimental import pallas as pl
from jax.experimental.pallas import tpu as pltpu


# ---------------------------------------------------------------------------
# Kernel
# ---------------------------------------------------------------------------
def _supcon_kernel(rows_ref, cols_ref, lab_col_ref, lab_row_ref, valid_ref,
                   loss_ref, *, eps_pos_total, has_padding, loss_scale):
    """One (tm)-row tile of the SupCon loss.

    rows_ref    : (tm, D)  normalized features * (1/T)     (bf16 or f32)
    cols_ref    : (D, Bp)  normalized features, transposed (bf16 or f32, resident)
    lab_col_ref : (tm, 1)  int32 labels of this row tile
    lab_row_ref : (1, Bp)  int32 labels of all columns     (resident)
    valid_ref   : (1, Bp)  f32, 1.0 real column / 0.0 padding (resident)
    loss_ref    : (tm, 1)  f32 per-row loss
    """
    # anchor_dot_contrast for this tile: MXU-native (tm, D) x (D, Bp), f32 acc.
    sim = lax.dot_general(
        rows_ref[...], cols_ref[...],
        dimension_numbers=(((1,), (0,)), ((), ())),
        preferred_element_type=jnp.float32)                        # (tm, Bp)
    tm, bp = sim.shape

    logits_max = jnp.max(sim, axis=1, keepdims=True)               # (tm, 1)
    logits = sim - logits_max                                      # (tm, Bp)
    exp_logits = jnp.exp(logits)                                   # (tm, Bp) EUP

    # Label-equality mask (the diagonal is handled separately below).
    mask = (lab_col_ref[...] == lab_row_ref[...]).astype(jnp.float32)  # (tm, Bp)

    # Exact logit of the "self" column via a one-hot row reduction: cheaper
    # than materializing log_probs / positives_mask, and exact under bf16.
    row_start = pl.program_id(0) * tm
    col_ids = lax.broadcasted_iota(jnp.int32, (tm, bp), 1)
    row_ids = lax.broadcasted_iota(jnp.int32, (tm, 1), 0) + row_start
    is_diag = col_ids == row_ids                                   # (tm, Bp)
    logit_self = jnp.sum(jnp.where(is_diag, logits, 0.0),
                         axis=1, keepdims=True)                    # (tm, 1)

    if has_padding:
        valid = valid_ref[...]                                     # (1, Bp)
        sum_exp = jnp.sum(exp_logits * valid, axis=1, keepdims=True)
        sum_logits = jnp.sum(logits * valid, axis=1, keepdims=True)
    else:
        sum_exp = jnp.sum(exp_logits, axis=1, keepdims=True)
        sum_logits = jnp.sum(logits, axis=1, keepdims=True)
    sum_logits_pos = jnp.sum(logits * mask, axis=1, keepdims=True)
    sum_mask = jnp.sum(mask, axis=1, keepdims=True)

    # Reference algebra with the diagonal folded out:
    #   denominator = sum(exp_logits * ((1 - eye) + 1e-6)) + 1e-6
    #   numerator   = sum((logits - log(den)) * (mask*(1 - eye) + 1e-6))
    denominator = (1.0 + 1e-6) * sum_exp - jnp.exp(logit_self) + 1e-6
    log_den = jnp.log(denominator)                                 # (tm, 1)
    num_pos = sum_mask - 1.0 + eps_pos_total                       # (tm, 1)
    numer = (sum_logits_pos - logit_self + 1e-6 * sum_logits
             - num_pos * log_den)
    per_row_log_prob = numer / (num_pos + 1e-6)

    loss_ref[...] = (-loss_scale) * per_row_log_prob


# ---------------------------------------------------------------------------
# Tiling / VMEM helpers
# ---------------------------------------------------------------------------
def _round_up(x: int, m: int) -> int:
    return (x + m - 1) // m * m


def _choose_row_tile(B: int) -> int:
    # 256-row tiles feed the 256-wide MXU on v6e/v7x; keep >= 2 grid steps
    # whenever the batch allows so both v7x TensorCores get work.
    if B >= 512:
        return 256
    if B > 128:
        return 128
    return max(8, _round_up(B, 8))      # small batches: a single (padded) tile


def _vmem_limit_bytes(estimate: int) -> int:
    capacity = 128 * 1024 * 1024
    try:
        capacity = int(getattr(pltpu.get_tpu_info(), "vmem_capacity_bytes",
                               capacity))
    except Exception:
        pass
    # Leave ~1/8 of physical VMEM as headroom for Mosaic-internal scratch.
    ceiling = max(capacity - capacity // 8, 16 * 1024 * 1024)
    return int(min(max(estimate, 8 * 1024 * 1024), ceiling))


def _supcon_pallas_call(kernel, rows_q, cols_t, lab_col, lab_row, valid, *,
                        tm, d, b_pad, compiler_params, cost,
                        single_buffer_resident):
    if single_buffer_resident:
        def _resident(shape):
            return pl.BlockSpec(shape, lambda i: (0, 0),
                                pipeline_mode=pl.Buffered(buffer_count=1))
    else:
        def _resident(shape):
            return pl.BlockSpec(shape, lambda i: (0, 0))

    return pl.pallas_call(
        kernel,
        out_shape=jax.ShapeDtypeStruct((b_pad, 1), jnp.float32),
        grid=(b_pad // tm,),
        in_specs=[
            pl.BlockSpec((tm, d), lambda i: (i, 0)),   # row tile (pre-scaled by 1/T)
            _resident((d, b_pad)),                     # transposed features, resident
            pl.BlockSpec((tm, 1), lambda i: (i, 0)),   # labels of this row tile
            _resident((1, b_pad)),                     # labels of all columns
            _resident((1, b_pad)),                     # column validity (padding)
        ],
        out_specs=pl.BlockSpec((tm, 1), lambda i: (i, 0)),
        compiler_params=compiler_params,
        cost_estimate=cost,
    )(rows_q, cols_t, lab_col, lab_row, valid)


# ---------------------------------------------------------------------------
# Public wrapper
# ---------------------------------------------------------------------------
def supcon_loss(features, labels, temperature=0.1, scale_by_temperature=True,
                precision="bfloat16"):
    """SupConLoss forward.  features: [B, D] float; labels: [B] int -> scalar f32.

    precision: "bfloat16" (fast MXU path, default) or "float32" (exact fallback).
    """
    features = jnp.asarray(features)
    labels = jnp.asarray(labels)
    if features.ndim != 2:
        raise ValueError("features must be [batch_size, hidden_dim]")
    B, D = features.shape
    if labels.shape[0] != B:
        raise ValueError("Num of labels does not match num of features")
    temperature = float(temperature)
    inv_t = 1.0 / temperature
    cdt = jnp.bfloat16 if precision == "bfloat16" else jnp.float32

    # ---- hoisted preprocessing (one fused XLA pass, nothing re-done per tile) --
    x32 = features.astype(jnp.float32)
    norm = jnp.sqrt(jnp.sum(x32 * x32, axis=1, keepdims=True))
    xn = x32 / jnp.maximum(norm, 1e-12)          # == F.normalize(..., eps=1e-12)

    rows_q = (xn * inv_t).astype(cdt)            # MXU row operand, 1/T folded in
    cols_q = xn.astype(cdt)                      # MXU column operand
    labels_i = labels.reshape(-1).astype(jnp.int32)

    tm = _choose_row_tile(B)
    b_pad = _round_up(B, tm)
    pad = b_pad - B
    if pad:
        rows_q = jnp.pad(rows_q, ((0, pad), (0, 0)))
        cols_q = jnp.pad(cols_q, ((0, pad), (0, 0)))
        sentinel = jnp.max(labels_i) + 1         # never equals a real label
        labels_i = jnp.concatenate(
            [labels_i, jnp.broadcast_to(sentinel, (pad,)).astype(jnp.int32)])

    cols_t = cols_q.T                            # (D, b_pad): MXU-native layout
    lab_col = labels_i.reshape(b_pad, 1)
    lab_row = labels_i.reshape(1, b_pad)
    valid = (jnp.arange(b_pad, dtype=jnp.int32) < B).astype(jnp.float32)
    valid = valid.reshape(1, b_pad)

    kernel = functools.partial(
        _supcon_kernel,
        eps_pos_total=1e-6 * B,
        has_padding=pad > 0,
        loss_scale=temperature if scale_by_temperature else 1.0,
    )

    csize = jnp.dtype(cdt).itemsize
    # Resident (D, b_pad) operand + double-buffered (tm, D) row tiles
    # + ~6 live (tm, b_pad) f32 temporaries + lane/sublane-padded small blocks.
    vmem_est = (2 * D * b_pad * csize + 2 * tm * D * csize
                + 6 * tm * b_pad * 4 + 6 * tm * 128 * 4 + 4 * 8 * b_pad * 4
                + (2 << 20))
    compiler_params = pltpu.CompilerParams(
        dimension_semantics=("parallel",),
        vmem_limit_bytes=_vmem_limit_bytes(vmem_est),
    )
    cost = pl.CostEstimate(
        flops=2 * b_pad * b_pad * D + 10 * b_pad * b_pad,
        transcendentals=b_pad * b_pad + 2 * b_pad,
        bytes_accessed=2 * b_pad * D * csize + 8 * b_pad * 4,
    )

    try:
        per_row = _supcon_pallas_call(
            kernel, rows_q, cols_t, lab_col, lab_row, valid,
            tm=tm, d=D, b_pad=b_pad, compiler_params=compiler_params,
            cost=cost, single_buffer_resident=True)
    except Exception:
        # pipeline_mode / pl.Buffered(1) not supported by this JAX build:
        # fall back to default double-buffered specs (correctness unaffected).
        per_row = _supcon_pallas_call(
            kernel, rows_q, cols_t, lab_col, lab_row, valid,
            tm=tm, d=D, b_pad=b_pad, compiler_params=compiler_params,
            cost=cost, single_buffer_resident=False)

    # Mean over the B real rows (padded rows dropped) + 1e-8, as in the module.
    return jnp.mean(per_row[:B, 0]) + 1e-08


# ---------------------------------------------------------------------------
# Pure-JAX reference mirroring the torch forward (correctness oracle)
# ---------------------------------------------------------------------------
def _supcon_ref(features, labels, temperature=0.1, scale_by_temperature=True):
    x = features.astype(jnp.float32)
    B = x.shape[0]
    xn = x / jnp.maximum(jnp.linalg.norm(x, axis=1, keepdims=True), 1e-12)
    sim = (xn @ xn.T) / temperature
    logits = sim - jnp.max(sim, axis=1, keepdims=True)
    exp_logits = jnp.exp(logits)
    mask = (labels[:, None] == labels[None, :]).astype(jnp.float32)
    logits_mask = 1.0 - jnp.eye(B, dtype=jnp.float32)
    pos = mask * logits_mask + 1e-06
    neg = 1.0 - mask
    num_pos = jnp.sum(pos, axis=1)
    denom = (jnp.sum(exp_logits * neg, axis=1, keepdims=True)
             + jnp.sum(exp_logits * pos, axis=1, keepdims=True) + 1e-06)
    log_probs = logits - jnp.log(denom)
    per_row = jnp.sum(log_probs * pos, axis=1) / (num_pos + 1e-06)
    loss = -per_row
    if scale_by_temperature:
        loss = loss * temperature
    return jnp.mean(loss) + 1e-08


if __name__ == "__main__":
    key = jax.random.PRNGKey(0)
    kf, kl, kf2, kl2 = jax.random.split(key, 4)

    # Case 1: batch divisible by the row tile (no padding), f32 MXU path.
    B, D = 8, 32
    feats = jax.random.normal(kf, (B, D), dtype=jnp.float32)
    labels = jax.random.randint(kl, (B,), 0, 3, dtype=jnp.int32)
    ref = jax.block_until_ready(_supcon_ref(feats, labels, 0.1, True))

    out_f32 = jax.block_until_ready(
        supcon_loss(feats, labels, temperature=0.1, scale_by_temperature=True,
                    precision="float32"))
    # The fused diagonal elimination reorders a few reductions relative to the
    # literal reference, so allow a ~1e-4-level deviation.
    np.testing.assert_allclose(np.asarray(out_f32), np.asarray(ref),
                               rtol=2e-3, atol=2e-4)

    # Case 2: same inputs on the default bf16-MXU fast path (relaxed tolerance).
    out_bf16 = jax.block_until_ready(
        supcon_loss(feats, labels, temperature=0.1, scale_by_temperature=True))
    np.testing.assert_allclose(np.asarray(out_bf16), np.asarray(ref),
                               rtol=5e-2, atol=5e-3)

    # Case 3: batch not a multiple of the tile -> padded columns/rows plus a
    # multi-step ("parallel") grid; f32 path for a tight check.
    B2 = 200
    feats2 = jax.random.normal(kf2, (B2, D), dtype=jnp.float32)
    labels2 = jax.random.randint(kl2, (B2,), 0, 4, dtype=jnp.int32)
    out_pad = jax.block_until_ready(
        supcon_loss(feats2, labels2, temperature=0.1, scale_by_temperature=True,
                    precision="float32"))
    ref2 = jax.block_until_ready(_supcon_ref(feats2, labels2, 0.1, True))
    np.testing.assert_allclose(np.asarray(out_pad), np.asarray(ref2),
                               rtol=2e-3, atol=2e-4)

    print("KERNEL_OK")
</pallas_src>

<mosaic_0001>
module attributes {stable_mosaic.version = 11 : i64} {
  func.func @_supcon_kernel(%arg0: i32, %arg1: memref<8x32xf32, #tpu.memory_space<vmem>>, %arg2: memref<32x8xf32, #tpu.memory_space<vmem>>, %arg3: memref<8x1xi32, #tpu.memory_space<vmem>>, %arg4: memref<1x8xi32, #tpu.memory_space<vmem>>, %arg5: memref<1x8xf32, #tpu.memory_space<vmem>>, %arg6: memref<8x1xf32, #tpu.memory_space<vmem>>) attributes {dimension_semantics = [#tpu.dimension_semantics<parallel>], iteration_bounds = array<i64: 1>, scalar_prefetch = 0 : i64, scratch_operands = 0 : i64, tpu.core_type = #tpu.core_type<tc>, window_params = [{transform_indices = @transform_0, window_bounds = array<i64: 8, 32>}, {pipeline_mode = #tpu.pipeline_mode<synchronous>, transform_indices = @transform_1, window_bounds = array<i64: 32, 8>}, {transform_indices = @transform_2, window_bounds = array<i64: 8, 1>}, {pipeline_mode = #tpu.pipeline_mode<synchronous>, transform_indices = @transform_3, window_bounds = array<i64: 1, 8>}, {pipeline_mode = #tpu.pipeline_mode<synchronous>, transform_indices = @transform_4, window_bounds = array<i64: 1, 8>}, {transform_indices = @transform_5, window_bounds = array<i64: 8, 1>}]} {
    %c0 = arith.constant 0 : index
    %c0_0 = arith.constant 0 : index
    %0 = vector.load %arg1[%c0, %c0_0] : memref<8x32xf32, #tpu.memory_space<vmem>>, vector<8x32xf32>
    %c0_1 = arith.constant 0 : index
    %c0_2 = arith.constant 0 : index
    %1 = vector.load %arg2[%c0_1, %c0_2] : memref<32x8xf32, #tpu.memory_space<vmem>>, vector<32x8xf32>
    %cst = arith.constant dense<0.000000e+00> : vector<8x8xf32>
    %2 = tpu.matmul %0, %1, %cst {dimension_numbers = #tpu.dot_dimension_numbers<[1], [0], [0], [1], [0, 0, 1, 1], [], []>} : vector<8x32xf32>, vector<32x8xf32>, vector<8x8xf32> -> vector<8x8xf32>
    %cst_3 = arith.constant dense<0xFF800000> : vector<8xf32>
    %3 = vector.multi_reduction <maximumf>, %2, %cst_3 [1] : vector<8x8xf32> to vector<8xf32>
    %4 = vector.shape_cast %3 : vector<8xf32> to vector<8x1xf32>
    %5 = vector.broadcast %4 : vector<8x1xf32> to vector<8x8xf32>
    %6 = arith.subf %2, %5 : vector<8x8xf32>
    %7 = math.exp %6 : vector<8x8xf32>
    %c0_4 = arith.constant 0 : index
    %c0_5 = arith.constant 0 : index
    %8 = vector.load %arg3[%c0_4, %c0_5] : memref<8x1xi32, #tpu.memory_space<vmem>>, vector<8x1xi32>
    %c0_6 = arith.constant 0 : index
    %c0_7 = arith.constant 0 : index
    %9 = vector.load %arg4[%c0_6, %c0_7] : memref<1x8xi32, #tpu.memory_space<vmem>>, vector<1x8xi32>
    %10 = vector.broadcast %8 : vector<8x1xi32> to vector<8x8xi32>
    %11 = vector.broadcast %9 : vector<1x8xi32> to vector<8x8xi32>
    %12 = arith.cmpi eq, %10, %11 : vector<8x8xi32>
    %13 = arith.extui %12 : vector<8x8xi1> to vector<8x8xi32>
    %14 = arith.sitofp %13 : vector<8x8xi32> to vector<8x8xf32>
    %c8_i32 = arith.constant 8 : i32
    %15 = arith.muli %arg0, %c8_i32 : i32
    %16 = tpu.iota {dimensions = array<i32: 1>} : vector<8x8xi32>
    %17 = tpu.iota {dimensions = array<i32: 0>} : vector<8x1xi32>
    %18 = vector.broadcast %15 : i32 to vector<8x1xi32>
    %19 = arith.addi %17, %18 : vector<8x1xi32>
    %20 = vector.broadcast %19 : vector<8x1xi32> to vector<8x8xi32>
    %21 = arith.cmpi eq, %16, %20 : vector<8x8xi32>
    %cst_8 = arith.constant 0.000000e+00 : f32
    %22 = vector.broadcast %cst_8 : f32 to vector<8x8xf32>
    %23 = arith.select %21, %6, %22 : vector<8x8xi1>, vector<8x8xf32>
    %cst_9 = arith.constant dense<0.000000e+00> : vector<8xf32>
    %24 = vector.multi_reduction <add>, %23, %cst_9 [1] : vector<8x8xf32> to vector<8xf32>
    %25 = vector.shape_cast %24 : vector<8xf32> to vector<8x1xf32>
    %cst_10 = arith.constant dense<0.000000e+00> : vector<8xf32>
    %26 = vector.multi_reduction <add>, %7, %cst_10 [1] : vector<8x8xf32> to vector<8xf32>
    %27 = vector.shape_cast %26 : vector<8xf32> to vector<8x1xf32>
    %cst_11 = arith.constant dense<0.000000e+00> : vector<8xf32>
    %28 = vector.multi_reduction <add>, %6, %cst_11 [1] : vector<8x8xf32> to vector<8xf32>
    %29 = vector.shape_cast %28 : vector<8xf32> to vector<8x1xf32>
    %30 = arith.mulf %6, %14 : vector<8x8xf32>
    %cst_12 = arith.constant dense<0.000000e+00> : vector<8xf32>
    %31 = vector.multi_reduction <add>, %30, %cst_12 [1] : vector<8x8xf32> to vector<8xf32>
    %32 = vector.shape_cast %31 : vector<8xf32> to vector<8x1xf32>
    %cst_13 = arith.constant dense<0.000000e+00> : vector<8xf32>
    %33 = vector.multi_reduction <add>, %14, %cst_13 [1] : vector<8x8xf32> to vector<8xf32>
    %34 = vector.shape_cast %33 : vector<8xf32> to vector<8x1xf32>
    %cst_14 = arith.constant 1.00000095 : f32
    %35 = vector.broadcast %cst_14 : f32 to vector<8x1xf32>
    %36 = arith.mulf %35, %27 : vector<8x1xf32>
    %37 = math.exp %25 : vector<8x1xf32>
    %38 = arith.subf %36, %37 : vector<8x1xf32>
    %cst_15 = arith.constant 9.99999997E-7 : f32
    %39 = vector.broadcast %cst_15 : f32 to vector<8x1xf32>
    %40 = arith.addf %38, %39 : vector<8x1xf32>
    %41 = math.log %40 : vector<8x1xf32>
    %cst_16 = arith.constant 1.000000e+00 : f32
    %42 = vector.broadcast %cst_16 : f32 to vector<8x1xf32>
    %43 = arith.subf %34, %42 : vector<8x1xf32>
    %cst_17 = arith.constant 8.000000e-06 : f32
    %44 = vector.broadcast %cst_17 : f32 to vector<8x1xf32>
    %45 = arith.addf %43, %44 : vector<8x1xf32>
    %46 = arith.subf %32, %25 : vector<8x1xf32>
    %cst_18 = arith.constant 9.99999997E-7 : f32
    %47 = vector.broadcast %cst_18 : f32 to vector<8x1xf32>
    %48 = arith.mulf %47, %29 : vector<8x1xf32>
    %49 = arith.addf %46, %48 : vector<8x1xf32>
    %50 = arith.mulf %45, %41 : vector<8x1xf32>
    %51 = arith.subf %49, %50 : vector<8x1xf32>
    %cst_19 = arith.constant 9.99999997E-7 : f32
    %52 = vector.broadcast %cst_19 : f32 to vector<8x1xf32>
    %53 = arith.addf %45, %52 : vector<8x1xf32>
    %54 = arith.divf %51, %53 : vector<8x1xf32>
    %cst_20 = arith.constant -1.000000e-01 : f32
    %55 = vector.broadcast %cst_20 : f32 to vector<8x1xf32>
    %56 = arith.mulf %55, %54 : vector<8x1xf32>
    %c0_21 = arith.constant 0 : index
    %c0_22 = arith.constant 0 : index
    %57 = vector.load %arg6[%c0_21, %c0_22] : memref<8x1xf32, #tpu.memory_space<vmem>>, vector<8x1xf32>
    tpu.vector_store %arg6[%c0_21, %c0_22], %56 {strides = array<i32>} : memref<8x1xf32, #tpu.memory_space<vmem>>, vector<8x1xf32>,
    return
  }
  func.func @transform_0(%arg0: i32) -> (i32, i32) {
    %c0_i32 = arith.constant 0 : i32
    %c0_i32_0 = arith.constant 0 : i32
    return %arg0, %c0_i32 : i32, i32
  }
  func.func @transform_1(%arg0: i32) -> (i32, i32) {
    %c0_i32 = arith.constant 0 : i32
    %c0_i32_0 = arith.constant 0 : i32
    %c0_i32_1 = arith.constant 0 : i32
    return %c0_i32, %c0_i32_0 : i32, i32
  }
  func.func @transform_2(%arg0: i32) -> (i32, i32) {
    %c0_i32 = arith.constant 0 : i32
    %c0_i32_0 = arith.constant 0 : i32
    return %arg0, %c0_i32 : i32, i32
  }
  func.func @transform_3(%arg0: i32) -> (i32, i32) {
    %c0_i32 = arith.constant 0 : i32
    %c0_i32_0 = arith.constant 0 : i32
    %c0_i32_1 = arith.constant 0 : i32
    return %c0_i32, %c0_i32_0 : i32, i32
  }
  func.func @transform_4(%arg0: i32) -> (i32, i32) {
    %c0_i32 = arith.constant 0 : i32
    %c0_i32_0 = arith.constant 0 : i32
    %c0_i32_1 = arith.constant 0 : i32
    return %c0_i32, %c0_i32_0 : i32, i32
  }
  func.func @transform_5(%arg0: i32) -> (i32, i32) {
    %c0_i32 = arith.constant 0 : i32
    %c0_i32_0 = arith.constant 0 : i32
    return %arg0, %c0_i32 : i32, i32
  }
}

module attributes {stable_mosaic.version = 11 : i64} {
  func.func @_supcon_kernel(%arg0: i32, %arg1: memref<8x32xf32, #tpu.memory_space<vmem>>, %arg2: memref<32x8xf32, #tpu.memory_space<vmem>>, %arg3: memref<8x1xi32, #tpu.memory_space<vmem>>, %arg4: memref<1x8xi32, #tpu.memory_space<vmem>>, %arg5: memref<1x8xf32, #tpu.memory_space<vmem>>, %arg6: memref<8x1xf32, #tpu.memory_space<vmem>>) attributes {dimension_semantics = [#tpu.dimension_semantics<parallel>], iteration_bounds = array<i64: 1>, scalar_prefetch = 0 : i64, scratch_operands = 0 : i64, tpu.core_type = #tpu.core_type<tc>, window_params = [{transform_indices = @transform_0, window_bounds = array<i64: 8, 32>}, {pipeline_mode = #tpu.pipeline_mode<synchronous>, transform_indices = @transform_1, window_bounds = array<i64: 32, 8>}, {transform_indices = @transform_2, window_bounds = array<i64: 8, 1>}, {pipeline_mode = #tpu.pipeline_mode<synchronous>, transform_indices = @transform_3, window_bounds = array<i64: 1, 8>}, {pipeline_mode = #tpu.pipeline_mode<synchronous>, transform_indices = @transform_4, window_bounds = array<i64: 1, 8>}, {transform_indices = @transform_5, window_bounds = array<i64: 8, 1>}]} {
    %c0 = arith.constant 0 : index
    %c0_0 = arith.constant 0 : index
    %0 = vector.load %arg1[%c0, %c0_0] : memref<8x32xf32, #tpu.memory_space<vmem>>, vector<8x32xf32>
    %c0_1 = arith.constant 0 : index
    %c0_2 = arith.constant 0 : index
    %1 = vector.load %arg2[%c0_1, %c0_2] : memref<32x8xf32, #tpu.memory_space<vmem>>, vector<32x8xf32>
    %cst = arith.constant dense<0.000000e+00> : vector<8x8xf32>
    %2 = tpu.matmul %0, %1, %cst {dimension_numbers = #tpu.dot_dimension_numbers<[1], [0], [0], [1], [0, 0, 1, 1], [], []>} : vector<8x32xf32>, vector<32x8xf32>, vector<8x8xf32> -> vector<8x8xf32>
    %cst_3 = arith.constant dense<0xFF800000> : vector<8xf32>
    %3 = vector.multi_reduction <maximumf>, %2, %cst_3 [1] : vector<8x8xf32> to vector<8xf32>
    %4 = vector.shape_cast %3 : vector<8xf32> to vector<8x1xf32>
    %5 = vector.broadcast %4 : vector<8x1xf32> to vector<8x8xf32>
    %6 = arith.subf %2, %5 : vector<8x8xf32>
    %7 = math.exp %6 : vector<8x8xf32>
    %c0_4 = arith.constant 0 : index
    %c0_5 = arith.constant 0 : index
    %8 = vector.load %arg3[%c0_4, %c0_5] : memref<8x1xi32, #tpu.memory_space<vmem>>, vector<8x1xi32>
    %c0_6 = arith.constant 0 : index
    %c0_7 = arith.constant 0 : index
    %9 = vector.load %arg4[%c0_6, %c0_7] : memref<1x8xi32, #tpu.memory_space<vmem>>, vector<1x8xi32>
    %10 = vector.broadcast %8 : vector<8x1xi32> to vector<8x8xi32>
    %11 = vector.broadcast %9 : vector<1x8xi32> to vector<8x8xi32>
    %12 = arith.cmpi eq, %10, %11 : vector<8x8xi32>
    %13 = arith.extui %12 : vector<8x8xi1> to vector<8x8xi32>
    %14 = arith.sitofp %13 : vector<8x8xi32> to vector<8x8xf32>
    %c8_i32 = arith.constant 8 : i32
    %15 = arith.muli %arg0, %c8_i32 : i32
    %16 = tpu.iota {dimensions = array<i32: 1>} : vector<8x8xi32>
    %17 = tpu.iota {dimensions = array<i32: 0>} : vector<8x1xi32>
    %18 = vector.broadcast %15 : i32 to vector<8x1xi32>
    %19 = arith.addi %17, %18 : vector<8x1xi32>
    %20 = vector.broadcast %19 : vector<8x1xi32> to vector<8x8xi32>
    %21 = arith.cmpi eq, %16, %20 : vector<8x8xi32>
    %cst_8 = arith.constant 0.000000e+00 : f32
    %22 = vector.broadcast %cst_8 : f32 to vector<8x8xf32>
    %23 = arith.select %21, %6, %22 : vector<8x8xi1>, vector<8x8xf32>
    %cst_9 = arith.constant dense<0.000000e+00> : vector<8xf32>
    %24 = vector.multi_reduction <add>, %23, %cst_9 [1] : vector<8x8xf32> to vector<8xf32>
    %25 = vector.shape_cast %24 : vector<8xf32> to vector<8x1xf32>
    %cst_10 = arith.constant dense<0.000000e+00> : vector<8xf32>
    %26 = vector.multi_reduction <add>, %7, %cst_10 [1] : vector<8x8xf32> to vector<8xf32>
    %27 = vector.shape_cast %26 : vector<8xf32> to vector<8x1xf32>
    %cst_11 = arith.constant dense<0.000000e+00> : vector<8xf32>
    %28 = vector.multi_reduction <add>, %6, %cst_11 [1] : vector<8x8xf32> to vector<8xf32>
    %29 = vector.shape_cast %28 : vector<8xf32> to vector<8x1xf32>
    %30 = arith.mulf %6, %14 : vector<8x8xf32>
    %cst_12 = arith.constant dense<0.000000e+00> : vector<8xf32>
    %31 = vector.multi_reduction <add>, %30, %cst_12 [1] : vector<8x8xf32> to vector<8xf32>
    %32 = vector.shape_cast %31 : vector<8xf32> to vector<8x1xf32>
    %cst_13 = arith.constant dense<0.000000e+00> : vector<8xf32>
    %33 = vector.multi_reduction <add>, %14, %cst_13 [1] : vector<8x8xf32> to vector<8xf32>
    %34 = vector.shape_cast %33 : vector<8xf32> to vector<8x1xf32>
    %cst_14 = arith.constant 1.00000095 : f32
    %35 = vector.broadcast %cst_14 : f32 to vector<8x1xf32>
    %36 = arith.mulf %35, %27 : vector<8x1xf32>
    %37 = math.exp %25 : vector<8x1xf32>
    %38 = arith.subf %36, %37 : vector<8x1xf32>
    %cst_15 = arith.constant 9.99999997E-7 : f32
    %39 = vector.broadcast %cst_15 : f32 to vector<8x1xf32>
    %40 = arith.addf %38, %39 : vector<8x1xf32>
    %41 = math.log %40 : vector<8x1xf32>
    %cst_16 = arith.constant 1.000000e+00 : f32
    %42 = vector.broadcast %cst_16 : f32 to vector<8x1xf32>
    %43 = arith.subf %34, %42 : vector<8x1xf32>
    %cst_17 = arith.constant 8.000000e-06 : f32
    %44 = vector.broadcast %cst_17 : f32 to vector<8x1xf32>
    %45 = arith.addf %43, %44 : vector<8x1xf32>
    %46 = arith.subf %32, %25 : vector<8x1xf32>
    %cst_18 = arith.constant 9.99999997E-7 : f32
    %47 = vector.broadcast %cst_18 : f32 to vector<8x1xf32>
    %48 = arith.mulf %47, %29 : vector<8x1xf32>
    %49 = arith.addf %46, %48 : vector<8x1xf32>
    %50 = arith.mulf %45, %41 : vector<8x1xf32>
    %51 = arith.subf %49, %50 : vector<8x1xf32>
    %cst_19 = arith.constant 9.99999997E-7 : f32
    %52 = vector.broadcast %cst_19 : f32 to vector<8x1xf32>
    %53 = arith.addf %45, %52 : vector<8x1xf32>
    %54 = arith.divf %51, %53 : vector<8x1xf32>
    %cst_20 = arith.constant -1.000000e-01 : f32
    %55 = vector.broadcast %cst_20 : f32 to vector<8x1xf32>
    %56 = arith.mulf %55, %54 : vector<8x1xf32>
    %c0_21 = arith.constant 0 : index
    %c0_22 = arith.constant 0 : index
    %57 = vector.load %arg6[%c0_21, %c0_22] : memref<8x1xf32, #tpu.memory_space<vmem>>, vector<8x1xf32>
    tpu.vector_store %arg6[%c0_21, %c0_22], %56 {strides = array<i32>} : memref<8x1xf32, #tpu.memory_space<vmem>>, vector<8x1xf32>,
    return
  }
  func.func @transform_0(%arg0: i32) -> (i32, i32) {
    %c0_i32 = arith.constant 0 : i32
    %c0_i32_0 = arith.constant 0 : i32
    return %arg0, %c0_i32 : i32, i32
  }
  func.func @transform_1(%arg0: i32) -> (i32, i32) {
    %c0_i32 = arith.constant 0 : i32
    %c0_i32_0 = arith.constant 0 : i32
    %c0_i32_1 = arith.constant 0 : i32
    return %c0_i32, %c0_i32_0 : i32, i32
  }
  func.func @transform_2(%arg0: i32) -> (i32, i32) {
    %c0_i32 = arith.constant 0 : i32
    %c0_i32_0 = arith.constant 0 : i32
    return %arg0, %c0_i32 : i32, i32
  }
  func.func @transform_3(%arg0: i32) -> (i32, i32) {
    %c0_i32 = arith.constant 0 : i32
    %c0_i32_0 = arith.constant 0 : i32
    %c0_i32_1 = arith.constant 0 : i32
    return %c0_i32, %c0_i32_0 : i32, i32
  }
  func.func @transform_4(%arg0: i32) -> (i32, i32) {
    %c0_i32 = arith.constant 0 : i32
    %c0_i32_0 = arith.constant 0 : i32
    %c0_i32_1 = arith.constant 0 : i32
    return %c0_i32, %c0_i32_0 : i32, i32
  }
  func.func @transform_5(%arg0: i32) -> (i32, i32) {
    %c0_i32 = arith.constant 0 : i32
    %c0_i32_0 = arith.constant 0 : i32
    return %arg0, %c0_i32 : i32, i32
  }
}

</mosaic_0001>

<llo_original>
// kernel: tpu_custom_call.1
$region0: #{tpu_custom_call.1}
  #allocation0 [shape = 'u32[]', space=smem, size = 0x4, offset = 0x4, fixed_abs, tag = 'smem constant byte address 0x4 - core index']
  #allocation1 [shape = 'u32[72,128]{1,0:T(1,128)}', space=vmem, size = 0x9000, scoped, tag = 'internal scratch']
  %s0 = inlined_call_operand.vmem [shape: f32[8,32], index: 0, kind: input, shape index: {}]
  %s1 = inlined_call_operand.vmem [shape: f32[32,8], index: 1, kind: input, shape index: {}]
  %s2 = inlined_call_operand.vmem [shape: s32[8,1], index: 2, kind: input, shape index: {}]
  %s3 = inlined_call_operand.vmem [shape: s32[1,8], index: 3, kind: input, shape index: {}]
  %s4 = inlined_call_operand.vmem [shape: f32[1,8], index: 4, kind: input, shape index: {}]
  %s5 = inlined_call_operand.vmem [shape: f32[8,1], index: 5, kind: output, shape index: {}]
  %s6 = sld [smem:[#allocation0]]
  $region30: #{tpu_custom_call.1} parent=0
    _
  %s8 = ssub.s32 1, %s6
  %s9 = scalar_select 0, %s8, %s6
  // Predicated region
  $region2: #{tpu_custom_call.1} parent=0 // pred_check
    _
  $region3: #{tpu_custom_call.1} parent=0 // pred_check_branch
    %11 = sbr.rel (0) target = $region5
  $region4: #{tpu_custom_call.1} parent=0 // pred_region
    _
  $region5: #{tpu_custom_call.1} parent=0 // pred_fallthru
    _
  // Predicated region
  $region6: #{tpu_custom_call.1} parent=0 // pred_check
    _
  $region7: #{tpu_custom_call.1} parent=0 // pred_check_branch
    %13 = sbr.rel (0) target = $region9
  $region8: #{tpu_custom_call.1} parent=0 // pred_region
    _
  $region9: #{tpu_custom_call.1} parent=0 // pred_fallthru
    _
  // Predicated region
  $region10: #{tpu_custom_call.1} parent=0 // pred_check
    _
  $region11: #{tpu_custom_call.1} parent=0 // pred_check_branch
    %15 = sbr.rel (0) target = $region13
  $region12: #{tpu_custom_call.1} parent=0 // pred_region
    _
  $region13: #{tpu_custom_call.1} parent=0 // pred_fallthru
    _
  // Predicated region
  $region14: #{tpu_custom_call.1} parent=0 // pred_check
    _
  $region15: #{tpu_custom_call.1} parent=0 // pred_check_branch
    %17 = sbr.rel (0) target = $region17
  $region16: #{tpu_custom_call.1} parent=0 // pred_region
    _
  $region17: #{tpu_custom_call.1} parent=0 // pred_fallthru
    _
  // Predicated region
  $region18: #{tpu_custom_call.1} parent=0 // pred_check
    _
  $region19: #{tpu_custom_call.1} parent=0 // pred_check_branch
    %19 = sbr.rel (0) target = $region21
  $region20: #{tpu_custom_call.1} parent=0 // pred_region
    _
  $region21: #{tpu_custom_call.1} parent=0 // pred_fallthru
    _
  %v20 = vld [vmem:[%s0] sm:$0xff]
  %v21 = vld [vmem:[%s1] sm:$0xff]
  %v22 = vld [vmem:[%s1 + $0x8] sm:$0xff]
  %v23 = vld [vmem:[%s1 + $0x10] sm:$0xff]
  %v24 = vld [vmem:[%s1 + $0x18] sm:$0xff]
  %vm25 = vcmask 261120
  %v27 = vsel %vm25, %v20, 0
  %29 = vmatpush.msra.mxu0 0.0
  %30 = vmatpush.msra.mxu0 0.0
  %31 = vmatpush.msra.mxu0 0.0
  %32 = vmatpush.msra.mxu0 0.0
  %33 = vmatpush.msra.mxu0 0.0
  %34 = vmatpush.msra.mxu0 0.0
  %35 = vmatpush.msra.mxu0 0.0
  %36 = vmatpush.msra.mxu0 0.0
  %37 = vmatpush.msra.mxu0 0.0
  %38 = vmatpush.msra.mxu0 0.0
  %39 = vmatpush.msra.mxu0 0.0
  %40 = vmatpush.msra.mxu0 0.0
  %41 = vmatpush.msra.mxu0 %v24
  %42 = vmatpush.msra.mxu0 %v23
  %43 = vmatpush.msra.mxu0 %v22
  %44 = vmatpush.msra.mxu0 %v21
  %45 = vmatmul.f32.gmra.mxu0 %v27
  %v46 = vpop.f32.mrf.mxu0
  %v47 = vadd.f32 0.0, %v46
  %48 = vdwg.mxu0
  %vm49 = vcmask 64512
  %v50 = vsel %vm49, %v47, -inf
  %51 = vmax.xlane.f32.xlu0 %v50
  %v52 = vpop.xlane.xlu0 %51
  %v53 = vsub.f32 %v47, %v52
  %v54 = vmul.f32 %v53, 1.442695
  %v55 = vpow.pop %v54
  %v56 = vld [vmem:[%s2] sm:$0xff]
  %v57 = vld [vmem:[%s3] sm:$0x1]
  %58 = vset.pattern.permute.xlu0 0
  %59 = vperm.xlu0 %58, %v56
  %v60 = vpop.permute.xlu0 %59
  %v61 = vperm.slane %v57, 0
  %vm62 = vcmp.eq.s32.totalorder %v60, %v61
  %v63 = vsel %vm62, 1, 0
  %v64 = vcvt.s32.f32 %v63
  %s65 = smul.u32 0, 8
  %v66 = vlaneseq
  %v67 = vand.u32 %v66, 127
  %v68 = vlaneseq
  %v69 = vshrl.u32 %v68, 7
  %v70 = vstv %s65
  %v71 = vadd.s32 %v69, %v70
  %vm72 = vcmp.eq.s32.totalorder %v67, %v71
  %v73 = vsel %vm72, %v53, 0.0
  %v74 = vsel %vm49, %v73, 0.0
  %75 = vadd.xlane.f32.xlu0 %v74
  %v76 = vpop.xlane.xlu0 %75
  %v77 = vsel %vm49, %v55, 0.0
  %78 = vadd.xlane.f32.xlu0 %v77
  %v79 = vpop.xlane.xlu0 %78
  %v80 = vsel %vm49, %v53, 0.0
  %81 = vadd.xlane.f32.xlu0 %v80
  %v82 = vpop.xlane.xlu0 %81
  %v83 = vmul.f32 %v53, %v64
  %v84 = vsel %vm49, %v83, 0.0
  %85 = vadd.xlane.f32.xlu0 %v84
  %v86 = vpop.xlane.xlu0 %85
  %v87 = vsel %vm49, %v64, 0.0
  %88 = vadd.xlane.f32.xlu0 %v87
  %v89 = vpop.xlane.xlu0 %88
  %v90 = vmul.f32 %v79, 1.000001
  %v91 = vmul.f32 %v76, 1.442695
  %v92 = vpow.pop %v91
  %v93 = vsub.f32 %v90, %v92
  %v94 = vadd.f32 %v93, 1e-06
  %v95 = vlog2.pop %v94
  %v96 = vmul.f32 %v95, 0.6931472
  %v97 = vsub.f32 %v89, 1.0
  %v98 = vadd.f32 %v97, 8e-06
  %v99 = vsub.f32 %v86, %v76
  %v100 = vmul.f32 %v82, 1e-06
  %v101 = vadd.f32 %v99, %v100
  %v102 = vmul.f32 %v98, %v96
  %v103 = vsub.f32 %v101, %v102
  %v104 = vadd.f32 %v98, 1e-06
  %v105 = vrcp.pop %v104
  %v106 = vmul.f32 %v104, %v105
  %v107 = vsub.f32 1.0, %v106
  %v108 = vmul.f32 %v105, %v107
  %v109 = vadd.f32 %v105, %v108
  %vm110 = vweird.f32 %v104
  %vm111 = vweird.f32 %v105
  %vm112 = vmor %vm110, %vm111
  %v113 = vsel %vm112, %v105, %v109
  %v114 = vand.u32 2147483647, %v104
  %vm115 = vcmp.eq.f32.partialorder %v114, 8.507059e+37
  %v116 = vand.u32 %v104, 2147483648
  %v117 = vor.u32 1.1754944e-38, %v116
  %v118 = vsel %vm115, %v117, %v113
  %v119 = vmul.f32 %v103, %v118
  %v120 = vmul.f32 %v119, -0.1
  %vm121 = vcmask 7168
  %122 = vst.msk [vmem:[%s5] sm:$0xff] %vm121, %v120
  // Predicated region
  $region22: #{tpu_custom_call.1} parent=0 // pred_check
    _
  $region23: #{tpu_custom_call.1} parent=0 // pred_check_branch
    %124 = sbr.rel (0) target = $region25
  $region24: #{tpu_custom_call.1} parent=0 // pred_region
    _
  $region25: #{tpu_custom_call.1} parent=0 // pred_fallthru
    _
  // Predicated region
  $region26: #{tpu_custom_call.1} parent=0 // pred_check
    _
  $region27: #{tpu_custom_call.1} parent=0 // pred_check_branch
    %126 = sbr.rel (0) target = $region29
  $region28: #{tpu_custom_call.1} parent=0 // pred_region
    _
  $region29: #{tpu_custom_call.1} parent=0 // pred_fallthru
    _

// kernel: tpu_custom_call.1
$region0: #{tpu_custom_call.1}
  #allocation0 [shape = 'u32[]', space=smem, size = 0x4, offset = 0x4, fixed_abs, tag = 'smem constant byte address 0x4 - core index']
  #allocation1 [shape = 'u32[72,128]{1,0:T(1,128)}', space=vmem, size = 0x9000, scoped, tag = 'internal scratch']
  %s0 = inlined_call_operand.vmem [shape: f32[8,32], index: 0, kind: input, shape index: {}]
  %s1 = inlined_call_operand.vmem [shape: f32[32,8], index: 1, kind: input, shape index: {}]
  %s2 = inlined_call_operand.vmem [shape: s32[8,1], index: 2, kind: input, shape index: {}]
  %s3 = inlined_call_operand.vmem [shape: s32[1,8], index: 3, kind: input, shape index: {}]
  %s4 = inlined_call_operand.vmem [shape: f32[1,8], index: 4, kind: input, shape index: {}]
  %s5 = inlined_call_operand.vmem [shape: f32[8,1], index: 5, kind: output, shape index: {}]
  %s6 = sld [smem:[#allocation0]]
  $region30: #{tpu_custom_call.1} parent=0
    _
  %s8 = ssub.s32 1, %s6
  %s9 = scalar_select 0, %s8, %s6
  // Predicated region
  $region2: #{tpu_custom_call.1} parent=0 // pred_check
    _
  $region3: #{tpu_custom_call.1} parent=0 // pred_check_branch
    %11 = sbr.rel (0) target = $region5
  $region4: #{tpu_custom_call.1} parent=0 // pred_region
    _
  $region5: #{tpu_custom_call.1} parent=0 // pred_fallthru
    _
  // Predicated region
  $region6: #{tpu_custom_call.1} parent=0 // pred_check
    _
  $region7: #{tpu_custom_call.1} parent=0 // pred_check_branch
    %13 = sbr.rel (0) target = $region9
  $region8: #{tpu_custom_call.1} parent=0 // pred_region
    _
  $region9: #{tpu_custom_call.1} parent=0 // pred_fallthru
    _
  // Predicated region
  $region10: #{tpu_custom_call.1} parent=0 // pred_check
    _
  $region11: #{tpu_custom_call.1} parent=0 // pred_check_branch
    %15 = sbr.rel (0) target = $region13
  $region12: #{tpu_custom_call.1} parent=0 // pred_region
    _
  $region13: #{tpu_custom_call.1} parent=0 // pred_fallthru
    _
  // Predicated region
  $region14: #{tpu_custom_call.1} parent=0 // pred_check
    _
  $region15: #{tpu_custom_call.1} parent=0 // pred_check_branch
    %17 = sbr.rel (0) target = $region17
  $region16: #{tpu_custom_call.1} parent=0 // pred_region
    _
  $region17: #{tpu_custom_call.1} parent=0 // pred_fallthru
    _
  // Predicated region
  $region18: #{tpu_custom_call.1} parent=0 // pred_check
    _
  $region19: #{tpu_custom_call.1} parent=0 // pred_check_branch
    %19 = sbr.rel (0) target = $region21
  $region20: #{tpu_custom_call.1} parent=0 // pred_region
    _
  $region21: #{tpu_custom_call.1} parent=0 // pred_fallthru
    _
  %v20 = vld [vmem:[%s0] sm:$0xff]
  %v21 = vld [vmem:[%s1] sm:$0xff]
  %v22 = vld [vmem:[%s1 + $0x8] sm:$0xff]
  %v23 = vld [vmem:[%s1 + $0x10] sm:$0xff]
  %v24 = vld [vmem:[%s1 + $0x18] sm:$0xff]
  %vm25 = vcmask 261120
  %v27 = vsel %vm25, %v20, 0
  %29 = vmatpush.msra.mxu0 0.0
  %30 = vmatpush.msra.mxu0 0.0
  %31 = vmatpush.msra.mxu0 0.0
  %32 = vmatpush.msra.mxu0 0.0
  %33 = vmatpush.msra.mxu0 0.0
  %34 = vmatpush.msra.mxu0 0.0
  %35 = vmatpush.msra.mxu0 0.0
  %36 = vmatpush.msra.mxu0 0.0
  %37 = vmatpush.msra.mxu0 0.0
  %38 = vmatpush.msra.mxu0 0.0
  %39 = vmatpush.msra.mxu0 0.0
  %40 = vmatpush.msra.mxu0 0.0
  %41 = vmatpush.msra.mxu0 %v24
  %42 = vmatpush.msra.mxu0 %v23
  %43 = vmatpush.msra.mxu0 %v22
  %44 = vmatpush.msra.mxu0 %v21
  %45 = vmatmul.f32.gmra.mxu0 %v27
  %v46 = vpop.f32.mrf.mxu0
  %v47 = vadd.f32 0.0, %v46
  %48 = vdwg.mxu0
  %vm49 = vcmask 64512
  %v50 = vsel %vm49, %v47, -inf
  %51 = vmax.xlane.f32.xlu0 %v50
  %v52 = vpop.xlane.xlu0 %51
  %v53 = vsub.f32 %v47, %v52
  %v54 = vmul.f32 %v53, 1.442695
  %v55 = vpow.pop %v54
  %v56 = vld [vmem:[%s2] sm:$0xff]
  %v57 = vld [vmem:[%s3] sm:$0x1]
  %58 = vset.pattern.permute.xlu0 0
  %59 = vperm.xlu0 %58, %v56
  %v60 = vpop.permute.xlu0 %59
  %v61 = vperm.slane %v57, 0
  %vm62 = vcmp.eq.s32.totalorder %v60, %v61
  %v63 = vsel %vm62, 1, 0
  %v64 = vcvt.s32.f32 %v63
  %s65 = smul.u32 0, 8
  %v66 = vlaneseq
  %v67 = vand.u32 %v66, 127
  %v68 = vlaneseq
  %v69 = vshrl.u32 %v68, 7
  %v70 = vstv %s65
  %v71 = vadd.s32 %v69, %v70
  %vm72 = vcmp.eq.s32.totalorder %v67, %v71
  %v73 = vsel %vm72, %v53, 0.0
  %v74 = vsel %vm49, %v73, 0.0
  %75 = vadd.xlane.f32.xlu0 %v74
  %v76 = vpop.xlane.xlu0 %75
  %v77 = vsel %vm49, %v55, 0.0
  %78 = vadd.xlane.f32.xlu0 %v77
  %v79 = vpop.xlane.xlu0 %78
  %v80 = vsel %vm49, %v53, 0.0
  %81 = vadd.xlane.f32.xlu0 %v80
  %v82 = vpop.xlane.xlu0 %81
  %v83 = vmul.f32 %v53, %v64
  %v84 = vsel %vm49, %v83, 0.0
  %85 = vadd.xlane.f32.xlu0 %v84
  %v86 = vpop.xlane.xlu0 %85
  %v87 = vsel %vm49, %v64, 0.0
  %88 = vadd.xlane.f32.xlu0 %v87
  %v89 = vpop.xlane.xlu0 %88
  %v90 = vmul.f32 %v79, 1.000001
  %v91 = vmul.f32 %v76, 1.442695
  %v92 = vpow.pop %v91
  %v93 = vsub.f32 %v90, %v92
  %v94 = vadd.f32 %v93, 1e-06
  %v95 = vlog2.pop %v94
  %v96 = vmul.f32 %v95, 0.6931472
  %v97 = vsub.f32 %v89, 1.0
  %v98 = vadd.f32 %v97, 8e-06
  %v99 = vsub.f32 %v86, %v76
  %v100 = vmul.f32 %v82, 1e-06
  %v101 = vadd.f32 %v99, %v100
  %v102 = vmul.f32 %v98, %v96
  %v103 = vsub.f32 %v101, %v102
  %v104 = vadd.f32 %v98, 1e-06
  %v105 = vrcp.pop %v104
  %v106 = vmul.f32 %v104, %v105
  %v107 = vsub.f32 1.0, %v106
  %v108 = vmul.f32 %v105, %v107
  %v109 = vadd.f32 %v105, %v108
  %vm110 = vweird.f32 %v104
  %vm111 = vweird.f32 %v105
  %vm112 = vmor %vm110, %vm111
  %v113 = vsel %vm112, %v105, %v109
  %v114 = vand.u32 2147483647, %v104
  %vm115 = vcmp.eq.f32.partialorder %v114, 8.507059e+37
  %v116 = vand.u32 %v104, 2147483648
  %v117 = vor.u32 1.1754944e-38, %v116
  %v118 = vsel %vm115, %v117, %v113
  %v119 = vmul.f32 %v103, %v118
  %v120 = vmul.f32 %v119, -0.1
  %vm121 = vcmask 7168
  %122 = vst.msk [vmem:[%s5] sm:$0xff] %vm121, %v120
  // Predicated region
  $region22: #{tpu_custom_call.1} parent=0 // pred_check
    _
  $region23: #{tpu_custom_call.1} parent=0 // pred_check_branch
    %124 = sbr.rel (0) target = $region25
  $region24: #{tpu_custom_call.1} parent=0 // pred_region
    _
  $region25: #{tpu_custom_call.1} parent=0 // pred_fallthru
    _
  // Predicated region
  $region26: #{tpu_custom_call.1} parent=0 // pred_check
    _
  $region27: #{tpu_custom_call.1} parent=0 // pred_check_branch
    %126 = sbr.rel (0) target = $region29
  $region28: #{tpu_custom_call.1} parent=0 // pred_region
    _
  $region29: #{tpu_custom_call.1} parent=0 // pred_fallthru
    _

</llo_original>
